<compile_context>
chip_gen: v5e
topology: v5e:2x2
jax: 0.10.0
libtpu: 0.0.40
codegen_flags: <defaults>
</compile_context>

<pallas_src>
import functools
import jax
import jax.numpy as jnp
from jax.experimental import pallas as pl
from jax.experimental.pallas import tpu as pltpu


# ----------------------------------------------------------------------------
# Fully-fused forward kernel: one grid step per batch element.
# ----------------------------------------------------------------------------
def fused_kernel(pos_ref, x_ref, afw_ref, abw_ref, wg_ref, bg_ref,
                 wh_ref, bh_ref, wr_ref, br_ref, out_ref, *, num_layers):
    b = pl.program_id(0)
    S, H = x_ref.shape[1], x_ref.shape[2]

    x0 = x_ref[0]                        # (S, H) transformer output
    afw = afw_ref[0]                     # (S, S) row-normalized fw adjacency
    abw = abw_ref[0]                     # (S, S) row-normalized bw adjacency

    # ---- GCN stack: out = leaky(afw_n @ (x Wfw + bfw)) + leaky(abw_n @ (x Wbw + bbw))
    # fw/bw projections merged into one (H, 2H) weight per layer.
    out = x0
    for l in range(num_layers):          # L is tiny -> fully unrolled, static indices
        h = jnp.dot(out, wg_ref[l], preferred_element_type=jnp.float32) + bg_ref[l]
        ofw = jnp.dot(afw, h[:, :H], preferred_element_type=jnp.float32)
        obw = jnp.dot(abw, h[:, H:], preferred_element_type=jnp.float32)
        out = (jnp.where(ofw >= 0.0, ofw, 0.01 * ofw)
               + jnp.where(obw >= 0.0, obw, 0.01 * obw))

    # ---- entity positions (SMEM scalars)
    e1s = pos_ref[b, 0]
    e1e = pos_ref[b, 1]
    e2s = pos_ref[b, 2]
    e2e = pos_ref[b, 3]

    # entity_start aggregation (entity_position_encoding != 'entity_tag')
    row1 = x_ref[0, pl.ds(e1s, 1), :]    # (1, H)
    row2 = x_ref[0, pl.ds(e2s, 1), :]    # (1, H)

    # max-pool over [start, end] (inclusive) of the GCN output
    idx = jax.lax.broadcasted_iota(jnp.int32, (S, H), 0)
    neg = jnp.float32(-3.4e38)           # large-finite sentinel (avoid -inf/NaN)
    g1 = jnp.max(jnp.where((idx >= e1s) & (idx <= e1e), out, neg),
                 axis=0, keepdims=True)  # (1, H)
    g2 = jnp.max(jnp.where((idx >= e2s) & (idx <= e2e), out, neg),
                 axis=0, keepdims=True)  # (1, H)

    # lane-dense packed feature vector: [seq_e1 | seq_e2 | graph_e1 | graph_e2]
    feat = jnp.concatenate([row1, row2, g1, g2], axis=1)        # (1, 4H)

    # ---- head: BN already folded into wh/bh; linear_s + linear_g stacked.
    rf = jnp.dot(feat, wh_ref[...], preferred_element_type=jnp.float32) + bh_ref[...]
    rf = jnp.where(rf >= 0.0, rf, 0.01 * rf)
    out_ref[0] = (jnp.dot(rf, wr_ref[...], preferred_element_type=jnp.float32)
                  + br_ref[...])


# ----------------------------------------------------------------------------
# Wrapper-side (one-time) parameter transforms.
# ----------------------------------------------------------------------------
def normalize_adj(adj):
    """Row-normalize the adjacency once (hoists sum+divide out of the kernel)."""
    rowsum = adj.sum(axis=2, keepdims=True)
    rowsum = jnp.where(rowsum == 0.0, 1.0, rowsum)
    return adj / rowsum


def prepare_params(gcn_fw_params, gcn_bw_params, bn_s, bn_g,
                   lin_s, lin_g, lin_rel, eps=1e-5):
    # stacked & merged GCN weights: (L, H, 2H) and (L, 1, 2H)
    wg = jnp.stack([jnp.concatenate([wfw_t, wbw_t], axis=1)
                    for (wfw_t, _), (wbw_t, _) in zip(gcn_fw_params, gcn_bw_params)])
    bg = jnp.stack([jnp.concatenate([bfw, bbw])[None, :]
                    for (_, bfw), (_, bbw) in zip(gcn_fw_params, gcn_bw_params)])

    # fold eval-mode BatchNorm into the following linear
    def fold_bn(bn, lin):
        gamma, beta, mean, var = bn
        wt, bias = lin                                  # wt: (2H, R)
        s = gamma * jax.lax.rsqrt(var + eps)            # (2H,)
        w_f = wt * s[:, None]
        b_f = (beta - mean * s) @ wt + bias
        return w_f, b_f

    ws_f, bs_f = fold_bn(bn_s, lin_s)
    wgr_f, bgr_f = fold_bn(bn_g, lin_g)
    whead = jnp.concatenate([ws_f, wgr_f], axis=0)      # (4H, R)
    bhead = (bs_f + bgr_f)[None, :]                     # (1, R)
    wrel = lin_rel[0]                                   # (R, num_rel)
    brel = lin_rel[1][None, :]                          # (1, num_rel)
    return wg, bg, whead, bhead, wrel, brel


def graph_pretrain_forward(pos_flat, seq_out, adj_fw, adj_bw,
                           wg, bg, whead, bhead, wrel, brel, *, average=True):
    B, S, H = seq_out.shape
    L = wg.shape[0]
    R = whead.shape[1]
    num_rel = wrel.shape[1]

    afw = normalize_adj(adj_fw) if average else adj_fw
    abw = normalize_adj(adj_bw) if average else adj_bw

    kern = functools.partial(fused_kernel, num_layers=L)
    out = pl.pallas_call(
        kern,
        out_shape=jax.ShapeDtypeStruct((B, 1, num_rel), jnp.float32),
        grid=(B,),
        in_specs=[
            pl.BlockSpec(memory_space=pltpu.MemorySpace.SMEM),        # pos
            pl.BlockSpec((1, S, H), lambda b: (b, 0, 0)),             # seq_out
            pl.BlockSpec((1, S, S), lambda b: (b, 0, 0)),             # adj_fw_norm
            pl.BlockSpec((1, S, S), lambda b: (b, 0, 0)),             # adj_bw_norm
            pl.BlockSpec((L, H, 2 * H), lambda b: (0, 0, 0)),         # gcn weights
            pl.BlockSpec((L, 1, 2 * H), lambda b: (0, 0, 0)),         # gcn biases
            pl.BlockSpec((4 * H, R), lambda b: (0, 0)),               # head W (BN-folded)
            pl.BlockSpec((1, R), lambda b: (0, 0)),                   # head b
            pl.BlockSpec((R, num_rel), lambda b: (0, 0)),             # rel W
            pl.BlockSpec((1, num_rel), lambda b: (0, 0)),             # rel b
        ],
        out_specs=pl.BlockSpec((1, 1, num_rel), lambda b: (b, 0, 0)),
        compiler_params=pltpu.CompilerParams(
            dimension_semantics=("parallel",)),   # shards batch across TCs on v7x
    )(pos_flat, seq_out, afw, abw, wg, bg, whead, bhead, wrel, brel)
    return out.reshape(B, num_rel)


# ----------------------------------------------------------------------------
# Pure-JAX reference (mirrors the PyTorch forward) for the correctness check.
# ----------------------------------------------------------------------------
def _leaky(x):
    return jnp.where(x >= 0.0, x, 0.01 * x)


def ref_forward(embed, input_ids, dep_fw, dep_bw, pos_flat,
                gcn_fw_params, gcn_bw_params,
                bn_s, bn_g, lin_s, lin_g, lin_rel, average):
    B, S = input_ids.shape
    tout = embed[input_ids]                                   # (B, S, H)

    arange_b = jnp.arange(B)
    sf = jnp.concatenate([tout[arange_b, pos_flat[:, 0]],
                          tout[arange_b, pos_flat[:, 2]]], axis=1)

    def gcn_ref(x, adj, wt, b):
        h = x @ wt + b
        o = jnp.einsum('bij,bjh->bih', adj, h)
        if average:
            ms = adj.sum(axis=2, keepdims=True)
            ms = jnp.where(ms == 0.0, 1.0, ms)
            o = o / ms
        return _leaky(o)

    out = tout
    for (wfw_t, bfw), (wbw_t, bbw) in zip(gcn_fw_params, gcn_bw_params):
        out = gcn_ref(out, dep_fw, wfw_t, bfw) + gcn_ref(out, dep_bw, wbw_t, bbw)

    idx = jnp.arange(S)
    gfs = []
    for b in range(B):
        m1 = (idx >= pos_flat[b, 0]) & (idx <= pos_flat[b, 1])
        m2 = (idx >= pos_flat[b, 2]) & (idx <= pos_flat[b, 3])
        g1 = jnp.max(jnp.where(m1[:, None], out[b], -jnp.inf), axis=0)
        g2 = jnp.max(jnp.where(m2[:, None], out[b], -jnp.inf), axis=0)
        gfs.append(jnp.concatenate([g1, g2]))
    gf = jnp.stack(gfs)

    def bn(x, p):
        g, be, m, v = p
        return (x - m) * jax.lax.rsqrt(v + 1e-5) * g + be

    rs = bn(sf, bn_s) @ lin_s[0] + lin_s[1]
    rg = bn(gf, bn_g) @ lin_g[0] + lin_g[1]
    rf = _leaky(rs + rg)
    return rf @ lin_rel[0] + lin_rel[1]


# ----------------------------------------------------------------------------
if __name__ == "__main__":
    B, S, H = 2, 8, 32          # batch, sequence length, hidden size
    R, NUM_REL = 16, 8          # rel_feature_size, num_rel
    L = 2                       # gcn_layer
    VOCAB = 50
    GCN_AVERAGE = True          # args.gcn_average
    # args.gcn_concatenate = False, model_architecture = 'joint'
    # aggregation_way = 'entity_start', graph_pool_fun = 'max'

    key = jax.random.PRNGKey(0)
    ks = jax.random.split(key, 40)
    ki = iter(ks)

    # TODO(synk): XLNetModel.from_pretrained(...) has no Pallas equivalent;
    # standing in with a deterministic embedding table as the encoder output.
    embed = jax.random.normal(next(ki), (VOCAB, H), jnp.float32) * 0.02

    stdv = 1.0 / (H ** 0.5)
    gcn_fw_params, gcn_bw_params = [], []
    for _ in range(L):
        wfw = jax.random.uniform(next(ki), (H, H), jnp.float32, -stdv, stdv)
        bfw = jax.random.uniform(next(ki), (H,), jnp.float32, -stdv, stdv)
        wbw = jax.random.uniform(next(ki), (H, H), jnp.float32, -stdv, stdv)
        bbw = jax.random.uniform(next(ki), (H,), jnp.float32, -stdv, stdv)
        gcn_fw_params.append((wfw.T, bfw))   # pre-transposed: x @ W^T
        gcn_bw_params.append((wbw.T, bbw))

    def make_linear(k, fan_in, fan_out):
        s = 1.0 / (fan_in ** 0.5)
        k1, k2 = jax.random.split(k)
        w = jax.random.uniform(k1, (fan_out, fan_in), jnp.float32, -s, s)
        b = jax.random.uniform(k2, (fan_out,), jnp.float32, -s, s)
        return w.T, b                        # pre-transposed

    lin_s = make_linear(next(ki), 2 * H, R)
    lin_g = make_linear(next(ki), 2 * H, R)
    lin_rel = make_linear(next(ki), R, NUM_REL)

    def make_bn(k, feat):
        k1, k2, k3, k4 = jax.random.split(k, 4)
        gamma = jax.random.uniform(k1, (feat,), jnp.float32, 0.5, 1.5)
        beta = jax.random.uniform(k2, (feat,), jnp.float32, -0.1, 0.1)
        rmean = jax.random.uniform(k3, (feat,), jnp.float32, -0.1, 0.1)
        rvar = jax.random.uniform(k4, (feat,), jnp.float32, 0.5, 1.5)
        return gamma, beta, rmean, rvar

    bn_s = make_bn(next(ki), 2 * H)
    bn_g = make_bn(next(ki), 2 * H)

    # ------------------------------ inputs --------------------------------
    input_ids = jax.random.randint(next(ki), (B, S), 0, VOCAB, jnp.int32)
    attn_mask = jnp.ones((B, S), jnp.float32)          # consumed only by XLNet
    token_type_ids = None                              # entity encoding is not 'token_type_ids'
    dep_fw = (jax.random.uniform(next(ki), (B, S, S)) > 0.5).astype(jnp.float32)
    dep_bw = jnp.transpose(dep_fw, (0, 2, 1))
    # en_positions[b] = ((e1_start, e1_end), (e2_start, e2_end))
    en_positions = jnp.array([[[2, 3], [5, 6]],
                              [[1, 2], [4, 7]]], jnp.int32)
    pos_flat = en_positions.reshape(B, 4)

    # ----------------------------- forward --------------------------------
    transformers_out = embed[input_ids]                 # (B, S, H)

    wg, bg, whead, bhead, wrel, brel = prepare_params(
        gcn_fw_params, gcn_bw_params, bn_s, bn_g, lin_s, lin_g, lin_rel)

    scores = graph_pretrain_forward(pos_flat, transformers_out, dep_fw, dep_bw,
                                    wg, bg, whead, bhead, wrel, brel,
                                    average=GCN_AVERAGE)
    scores = jax.block_until_ready(scores)

    # --------------------------- verification -----------------------------
    ref = ref_forward(embed, input_ids, dep_fw, dep_bw, pos_flat,
                      gcn_fw_params, gcn_bw_params,
                      bn_s, bn_g, lin_s, lin_g, lin_rel, GCN_AVERAGE)
    assert scores.shape == (B, NUM_REL)
    assert jnp.allclose(scores, ref, rtol=1e-4, atol=1e-4), (scores, ref)

    print("KERNEL_OK")
</pallas_src>

<mosaic_0001>
module attributes {stable_mosaic.version = 11 : i64} {
  func.func @fused_kernel(%arg0: i32, %arg1: memref<2x4xi32, #tpu.memory_space<smem>>, %arg2: memref<1x8x32xf32, #tpu.memory_space<vmem>>, %arg3: memref<1x8x8xf32, #tpu.memory_space<vmem>>, %arg4: memref<1x8x8xf32, #tpu.memory_space<vmem>>, %arg5: memref<2x32x64xf32, #tpu.memory_space<vmem>>, %arg6: memref<2x1x64xf32, #tpu.memory_space<vmem>>, %arg7: memref<128x16xf32, #tpu.memory_space<vmem>>, %arg8: memref<1x16xf32, #tpu.memory_space<vmem>>, %arg9: memref<16x8xf32, #tpu.memory_space<vmem>>, %arg10: memref<1x8xf32, #tpu.memory_space<vmem>>, %arg11: memref<1x1x8xf32, #tpu.memory_space<vmem>>) attributes {dimension_semantics = [#tpu.dimension_semantics<parallel>], iteration_bounds = array<i64: 2>, scalar_prefetch = 0 : i64, scratch_operands = 0 : i64, tpu.core_type = #tpu.core_type<tc>, window_params = [{transform_indices = @transform_0, window_bounds = array<i64: 2, 4>}, {transform_indices = @transform_1, window_bounds = array<i64: 1, 8, 32>}, {transform_indices = @transform_2, window_bounds = array<i64: 1, 8, 8>}, {transform_indices = @transform_3, window_bounds = array<i64: 1, 8, 8>}, {pipeline_mode = #tpu.pipeline_mode<synchronous>, transform_indices = @transform_4, window_bounds = array<i64: 2, 32, 64>}, {pipeline_mode = #tpu.pipeline_mode<synchronous>, transform_indices = @transform_5, window_bounds = array<i64: 2, 1, 64>}, {pipeline_mode = #tpu.pipeline_mode<synchronous>, transform_indices = @transform_6, window_bounds = array<i64: 128, 16>}, {pipeline_mode = #tpu.pipeline_mode<synchronous>, transform_indices = @transform_7, window_bounds = array<i64: 1, 16>}, {pipeline_mode = #tpu.pipeline_mode<synchronous>, transform_indices = @transform_8, window_bounds = array<i64: 16, 8>}, {pipeline_mode = #tpu.pipeline_mode<synchronous>, transform_indices = @transform_9, window_bounds = array<i64: 1, 8>}, {transform_indices = @transform_10, window_bounds = array<i64: 1, 1, 8>}]} {
    %c0 = arith.constant 0 : index
    %c0_0 = arith.constant 0 : index
    %c0_1 = arith.constant 0 : index
    %0 = vector.load %arg2[%c0, %c0_0, %c0_1] : memref<1x8x32xf32, #tpu.memory_space<vmem>>, vector<1x8x32xf32>
    %1 = vector.shape_cast %0 : vector<1x8x32xf32> to vector<8x32xf32>
    %c0_2 = arith.constant 0 : index
    %c0_3 = arith.constant 0 : index
    %c0_4 = arith.constant 0 : index
    %2 = vector.load %arg3[%c0_2, %c0_3, %c0_4] : memref<1x8x8xf32, #tpu.memory_space<vmem>>, vector<1x8x8xf32>
    %3 = vector.shape_cast %2 : vector<1x8x8xf32> to vector<8x8xf32>
    %c0_5 = arith.constant 0 : index
    %c0_6 = arith.constant 0 : index
    %c0_7 = arith.constant 0 : index
    %4 = vector.load %arg4[%c0_5, %c0_6, %c0_7] : memref<1x8x8xf32, #tpu.memory_space<vmem>>, vector<1x8x8xf32>
    %5 = vector.shape_cast %4 : vector<1x8x8xf32> to vector<8x8xf32>
    %c0_8 = arith.constant 0 : index
    %c0_9 = arith.constant 0 : index
    %c0_10 = arith.constant 0 : index
    %6 = vector.load %arg5[%c0_8, %c0_9, %c0_10] : memref<2x32x64xf32, #tpu.memory_space<vmem>>, vector<1x32x64xf32>
    %7 = vector.shape_cast %6 : vector<1x32x64xf32> to vector<32x64xf32>
    %cst = arith.constant dense<0.000000e+00> : vector<8x64xf32>
    %8 = tpu.matmul %1, %7, %cst {dimension_numbers = #tpu.dot_dimension_numbers<[1], [0], [0], [1], [0, 0, 1, 1], [], []>} : vector<8x32xf32>, vector<32x64xf32>, vector<8x64xf32> -> vector<8x64xf32>
    %c0_11 = arith.constant 0 : index
    %c0_12 = arith.constant 0 : index
    %c0_13 = arith.constant 0 : index
    %9 = vector.load %arg6[%c0_11, %c0_12, %c0_13] : memref<2x1x64xf32, #tpu.memory_space<vmem>>, vector<1x1x64xf32>
    %10 = vector.shape_cast %9 : vector<1x1x64xf32> to vector<1x64xf32>
    %11 = vector.broadcast %10 : vector<1x64xf32> to vector<8x64xf32>
    %12 = arith.addf %8, %11 : vector<8x64xf32>
    %13 = vector.extract_strided_slice %12 {offsets = [0, 0], sizes = [8, 32], strides = [1, 1]} : vector<8x64xf32> to vector<8x32xf32>
    %cst_14 = arith.constant dense<0.000000e+00> : vector<8x32xf32>
    %14 = tpu.matmul %3, %13, %cst_14 {dimension_numbers = #tpu.dot_dimension_numbers<[1], [0], [0], [1], [0, 0, 1, 1], [], []>} : vector<8x8xf32>, vector<8x32xf32>, vector<8x32xf32> -> vector<8x32xf32>
    %15 = vector.extract_strided_slice %12 {offsets = [0, 32], sizes = [8, 32], strides = [1, 1]} : vector<8x64xf32> to vector<8x32xf32>
    %cst_15 = arith.constant dense<0.000000e+00> : vector<8x32xf32>
    %16 = tpu.matmul %5, %15, %cst_15 {dimension_numbers = #tpu.dot_dimension_numbers<[1], [0], [0], [1], [0, 0, 1, 1], [], []>} : vector<8x8xf32>, vector<8x32xf32>, vector<8x32xf32> -> vector<8x32xf32>
    %cst_16 = arith.constant 0.000000e+00 : f32
    %17 = vector.broadcast %cst_16 : f32 to vector<8x32xf32>
    %18 = arith.cmpf oge, %14, %17 : vector<8x32xf32>
    %cst_17 = arith.constant 0.00999999977 : f32
    %19 = vector.broadcast %cst_17 : f32 to vector<8x32xf32>
    %20 = arith.mulf %19, %14 : vector<8x32xf32>
    %21 = arith.select %18, %14, %20 : vector<8x32xi1>, vector<8x32xf32>
    %cst_18 = arith.constant 0.000000e+00 : f32
    %22 = vector.broadcast %cst_18 : f32 to vector<8x32xf32>
    %23 = arith.cmpf oge, %16, %22 : vector<8x32xf32>
    %cst_19 = arith.constant 0.00999999977 : f32
    %24 = vector.broadcast %cst_19 : f32 to vector<8x32xf32>
    %25 = arith.mulf %24, %16 : vector<8x32xf32>
    %26 = arith.select %23, %16, %25 : vector<8x32xi1>, vector<8x32xf32>
    %27 = arith.addf %21, %26 : vector<8x32xf32>
    %c1 = arith.constant 1 : index
    %c0_20 = arith.constant 0 : index
    %c0_21 = arith.constant 0 : index
    %28 = vector.load %arg5[%c1, %c0_20, %c0_21] : memref<2x32x64xf32, #tpu.memory_space<vmem>>, vector<1x32x64xf32>
    %29 = vector.shape_cast %28 : vector<1x32x64xf32> to vector<32x64xf32>
    %cst_22 = arith.constant dense<0.000000e+00> : vector<8x64xf32>
    %30 = tpu.matmul %27, %29, %cst_22 {dimension_numbers = #tpu.dot_dimension_numbers<[1], [0], [0], [1], [0, 0, 1, 1], [], []>} : vector<8x32xf32>, vector<32x64xf32>, vector<8x64xf32> -> vector<8x64xf32>
    %c1_23 = arith.constant 1 : index
    %c0_24 = arith.constant 0 : index
    %c0_25 = arith.constant 0 : index
    %31 = vector.load %arg6[%c1_23, %c0_24, %c0_25] : memref<2x1x64xf32, #tpu.memory_space<vmem>>, vector<1x1x64xf32>
    %32 = vector.shape_cast %31 : vector<1x1x64xf32> to vector<1x64xf32>
    %33 = vector.broadcast %32 : vector<1x64xf32> to vector<8x64xf32>
    %34 = arith.addf %30, %33 : vector<8x64xf32>
    %35 = vector.extract_strided_slice %34 {offsets = [0, 0], sizes = [8, 32], strides = [1, 1]} : vector<8x64xf32> to vector<8x32xf32>
    %cst_26 = arith.constant dense<0.000000e+00> : vector<8x32xf32>
    %36 = tpu.matmul %3, %35, %cst_26 {dimension_numbers = #tpu.dot_dimension_numbers<[1], [0], [0], [1], [0, 0, 1, 1], [], []>} : vector<8x8xf32>, vector<8x32xf32>, vector<8x32xf32> -> vector<8x32xf32>
    %37 = vector.extract_strided_slice %34 {offsets = [0, 32], sizes = [8, 32], strides = [1, 1]} : vector<8x64xf32> to vector<8x32xf32>
    %cst_27 = arith.constant dense<0.000000e+00> : vector<8x32xf32>
    %38 = tpu.matmul %5, %37, %cst_27 {dimension_numbers = #tpu.dot_dimension_numbers<[1], [0], [0], [1], [0, 0, 1, 1], [], []>} : vector<8x8xf32>, vector<8x32xf32>, vector<8x32xf32> -> vector<8x32xf32>
    %cst_28 = arith.constant 0.000000e+00 : f32
    %39 = vector.broadcast %cst_28 : f32 to vector<8x32xf32>
    %40 = arith.cmpf oge, %36, %39 : vector<8x32xf32>
    %cst_29 = arith.constant 0.00999999977 : f32
    %41 = vector.broadcast %cst_29 : f32 to vector<8x32xf32>
    %42 = arith.mulf %41, %36 : vector<8x32xf32>
    %43 = arith.select %40, %36, %42 : vector<8x32xi1>, vector<8x32xf32>
    %cst_30 = arith.constant 0.000000e+00 : f32
    %44 = vector.broadcast %cst_30 : f32 to vector<8x32xf32>
    %45 = arith.cmpf oge, %38, %44 : vector<8x32xf32>
    %cst_31 = arith.constant 0.00999999977 : f32
    %46 = vector.broadcast %cst_31 : f32 to vector<8x32xf32>
    %47 = arith.mulf %46, %38 : vector<8x32xf32>
    %48 = arith.select %45, %38, %47 : vector<8x32xi1>, vector<8x32xf32>
    %49 = arith.addf %43, %48 : vector<8x32xf32>
    %50 = arith.index_cast %arg0 : i32 to index
    %c0_32 = arith.constant 0 : index
    %51 = memref.load %arg1[%50, %c0_32] : memref<2x4xi32, #tpu.memory_space<smem>>
    %52 = arith.index_cast %arg0 : i32 to index
    %c1_33 = arith.constant 1 : index
    %53 = memref.load %arg1[%52, %c1_33] : memref<2x4xi32, #tpu.memory_space<smem>>
    %54 = arith.index_cast %arg0 : i32 to index
    %c2 = arith.constant 2 : index
    %55 = memref.load %arg1[%54, %c2] : memref<2x4xi32, #tpu.memory_space<smem>>
    %56 = arith.index_cast %arg0 : i32 to index
    %c3 = arith.constant 3 : index
    %57 = memref.load %arg1[%56, %c3] : memref<2x4xi32, #tpu.memory_space<smem>>
    %c0_34 = arith.constant 0 : index
    %58 = arith.index_cast %51 : i32 to index
    %c0_35 = arith.constant 0 : index
    %59 = vector.load %arg2[%c0_34, %58, %c0_35] : memref<1x8x32xf32, #tpu.memory_space<vmem>>, vector<1x1x32xf32>
    %60 = vector.shape_cast %59 : vector<1x1x32xf32> to vector<1x32xf32>
    %c0_36 = arith.constant 0 : index
    %61 = arith.index_cast %55 : i32 to index
    %c0_37 = arith.constant 0 : index
    %62 = vector.load %arg2[%c0_36, %61, %c0_37] : memref<1x8x32xf32, #tpu.memory_space<vmem>>, vector<1x1x32xf32>
    %63 = vector.shape_cast %62 : vector<1x1x32xf32> to vector<1x32xf32>
    %64 = tpu.iota {dimensions = array<i32: 0>} : vector<8x32xi32>
    %65 = vector.broadcast %51 : i32 to vector<8x32xi32>
    %66 = arith.cmpi sge, %64, %65 : vector<8x32xi32>
    %67 = vector.broadcast %53 : i32 to vector<8x32xi32>
    %68 = arith.cmpi sle, %64, %67 : vector<8x32xi32>
    %69 = arith.andi %66, %68 : vector<8x32xi1>
    %cst_38 = arith.constant -3.400000e+38 : f32
    %70 = vector.broadcast %cst_38 : f32 to vector<8x32xf32>
    %71 = arith.select %69, %49, %70 : vector<8x32xi1>, vector<8x32xf32>
    %cst_39 = arith.constant dense<0xFF800000> : vector<32xf32>
    %72 = vector.multi_reduction <maximumf>, %71, %cst_39 [0] : vector<8x32xf32> to vector<32xf32>
    %73 = vector.shape_cast %72 : vector<32xf32> to vector<1x32xf32>
    %74 = vector.broadcast %55 : i32 to vector<8x32xi32>
    %75 = arith.cmpi sge, %64, %74 : vector<8x32xi32>
    %76 = vector.broadcast %57 : i32 to vector<8x32xi32>
    %77 = arith.cmpi sle, %64, %76 : vector<8x32xi32>
    %78 = arith.andi %75, %77 : vector<8x32xi1>
    %cst_40 = arith.constant -3.400000e+38 : f32
    %79 = vector.broadcast %cst_40 : f32 to vector<8x32xf32>
    %80 = arith.select %78, %49, %79 : vector<8x32xi1>, vector<8x32xf32>
    %cst_41 = arith.constant dense<0xFF800000> : vector<32xf32>
    %81 = vector.multi_reduction <maximumf>, %80, %cst_41 [0] : vector<8x32xf32> to vector<32xf32>
    %82 = vector.shape_cast %81 : vector<32xf32> to vector<1x32xf32>
    %83 = tpu.concatenate %60, %63, %73, %82 in 1 : vector<1x32xf32>, vector<1x32xf32>, vector<1x32xf32>, vector<1x32xf32> -> vector<1x128xf32>
    %c0_42 = arith.constant 0 : index
    %c0_43 = arith.constant 0 : index
    %84 = vector.load %arg7[%c0_42, %c0_43] : memref<128x16xf32, #tpu.memory_space<vmem>>, vector<128x16xf32>
    %cst_44 = arith.constant dense<0.000000e+00> : vector<1x16xf32>
    %85 = tpu.matmul %83, %84, %cst_44 {dimension_numbers = #tpu.dot_dimension_numbers<[1], [0], [0], [1], [0, 0, 1, 1], [], []>} : vector<1x128xf32>, vector<128x16xf32>, vector<1x16xf32> -> vector<1x16xf32>
    %c0_45 = arith.constant 0 : index
    %c0_46 = arith.constant 0 : index
    %86 = vector.load %arg8[%c0_45, %c0_46] : memref<1x16xf32, #tpu.memory_space<vmem>>, vector<1x16xf32>
    %87 = arith.addf %85, %86 : vector<1x16xf32>
    %cst_47 = arith.constant 0.000000e+00 : f32
    %88 = vector.broadcast %cst_47 : f32 to vector<1x16xf32>
    %89 = arith.cmpf oge, %87, %88 : vector<1x16xf32>
    %cst_48 = arith.constant 0.00999999977 : f32
    %90 = vector.broadcast %cst_48 : f32 to vector<1x16xf32>
    %91 = arith.mulf %90, %87 : vector<1x16xf32>
    %92 = arith.select %89, %87, %91 : vector<1x16xi1>, vector<1x16xf32>
    %c0_49 = arith.constant 0 : index
    %c0_50 = arith.constant 0 : index
    %93 = vector.load %arg9[%c0_49, %c0_50] : memref<16x8xf32, #tpu.memory_space<vmem>>, vector<16x8xf32>
    %cst_51 = arith.constant dense<0.000000e+00> : vector<1x8xf32>
    %94 = tpu.matmul %92, %93, %cst_51 {dimension_numbers = #tpu.dot_dimension_numbers<[1], [0], [0], [1], [0, 0, 1, 1], [], []>} : vector<1x16xf32>, vector<16x8xf32>, vector<1x8xf32> -> vector<1x8xf32>
    %c0_52 = arith.constant 0 : index
    %c0_53 = arith.constant 0 : index
    %95 = vector.load %arg10[%c0_52, %c0_53] : memref<1x8xf32, #tpu.memory_space<vmem>>, vector<1x8xf32>
    %96 = arith.addf %94, %95 : vector<1x8xf32>
    %c0_54 = arith.constant 0 : index
    %c0_55 = arith.constant 0 : index
    %c0_56 = arith.constant 0 : index
    %97 = vector.load %arg11[%c0_54, %c0_55, %c0_56] : memref<1x1x8xf32, #tpu.memory_space<vmem>>, vector<1x1x8xf32>
    %98 = vector.shape_cast %97 : vector<1x1x8xf32> to vector<1x8xf32>
    %99 = vector.shape_cast %96 : vector<1x8xf32> to vector<1x1x8xf32>
    tpu.vector_store %arg11[%c0_54, %c0_55, %c0_56], %99 {strides = array<i32>} : memref<1x1x8xf32, #tpu.memory_space<vmem>>, vector<1x1x8xf32>,
    return
  }
  func.func @transform_0(%arg0: i32) -> (i32, i32) {
    %c0_i32 = arith.constant 0 : i32
    %c0_i32_0 = arith.constant 0 : i32
    %c0_i32_1 = arith.constant 0 : i32
    return %c0_i32, %c0_i32_0 : i32, i32
  }
  func.func @transform_1(%arg0: i32) -> (i32, i32, i32) {
    %c0_i32 = arith.constant 0 : i32
    %c0_i32_0 = arith.constant 0 : i32
    %c0_i32_1 = arith.constant 0 : i32
    return %arg0, %c0_i32, %c0_i32_0 : i32, i32, i32
  }
  func.func @transform_2(%arg0: i32) -> (i32, i32, i32) {
    %c0_i32 = arith.constant 0 : i32
    %c0_i32_0 = arith.constant 0 : i32
    %c0_i32_1 = arith.constant 0 : i32
    return %arg0, %c0_i32, %c0_i32_0 : i32, i32, i32
  }
  func.func @transform_3(%arg0: i32) -> (i32, i32, i32) {
    %c0_i32 = arith.constant 0 : i32
    %c0_i32_0 = arith.constant 0 : i32
    %c0_i32_1 = arith.constant 0 : i32
    return %arg0, %c0_i32, %c0_i32_0 : i32, i32, i32
  }
  func.func @transform_4(%arg0: i32) -> (i32, i32, i32) {
    %c0_i32 = arith.constant 0 : i32
    %c0_i32_0 = arith.constant 0 : i32
    %c0_i32_1 = arith.constant 0 : i32
    %c0_i32_2 = arith.constant 0 : i32
    return %c0_i32, %c0_i32_0, %c0_i32_1 : i32, i32, i32
  }
  func.func @transform_5(%arg0: i32) -> (i32, i32, i32) {
    %c0_i32 = arith.constant 0 : i32
    %c0_i32_0 = arith.constant 0 : i32
    %c0_i32_1 = arith.constant 0 : i32
    %c0_i32_2 = arith.constant 0 : i32
    return %c0_i32, %c0_i32_0, %c0_i32_1 : i32, i32, i32
  }
  func.func @transform_6(%arg0: i32) -> (i32, i32) {
    %c0_i32 = arith.constant 0 : i32
    %c0_i32_0 = arith.constant 0 : i32
    %c0_i32_1 = arith.constant 0 : i32
    return %c0_i32, %c0_i32_0 : i32, i32
  }
  func.func @transform_7(%arg0: i32) -> (i32, i32) {
    %c0_i32 = arith.constant 0 : i32
    %c0_i32_0 = arith.constant 0 : i32
    %c0_i32_1 = arith.constant 0 : i32
    return %c0_i32, %c0_i32_0 : i32, i32
  }
  func.func @transform_8(%arg0: i32) -> (i32, i32) {
    %c0_i32 = arith.constant 0 : i32
    %c0_i32_0 = arith.constant 0 : i32
    %c0_i32_1 = arith.constant 0 : i32
    return %c0_i32, %c0_i32_0 : i32, i32
  }
  func.func @transform_9(%arg0: i32) -> (i32, i32) {
    %c0_i32 = arith.constant 0 : i32
    %c0_i32_0 = arith.constant 0 : i32
    %c0_i32_1 = arith.constant 0 : i32
    return %c0_i32, %c0_i32_0 : i32, i32
  }
  func.func @transform_10(%arg0: i32) -> (i32, i32, i32) {
    %c0_i32 = arith.constant 0 : i32
    %c0_i32_0 = arith.constant 0 : i32
    %c0_i32_1 = arith.constant 0 : i32
    return %arg0, %c0_i32, %c0_i32_0 : i32, i32, i32
  }
}

</mosaic_0001>

<llo_original>
// kernel: tpu_custom_call.1
$region0: #{tpu_custom_call.1}
  #allocation0 [shape = 'u32[]', space=smem, size = 0x4, offset = 0x4, fixed_abs, tag = 'smem constant byte address 0x4 - core index']
  #allocation1 [shape = 'u32[72,128]{1,0:T(1,128)}', space=vmem, size = 0x9000, scoped, tag = 'internal scratch']
  %s0 = inlined_call_operand.vmem [shape: s32[2,4], index: 0, kind: input, shape index: {}]
  %s1 = inlined_call_operand.vmem [shape: f32[2,8,32], index: 1, kind: input, shape index: {}]
  %s2 = inlined_call_operand.vmem [shape: f32[2,8,8], index: 2, kind: input, shape index: {}]
  %s3 = inlined_call_operand.vmem [shape: f32[2,8,8], index: 3, kind: input, shape index: {}]
  %s4 = inlined_call_operand.vmem [shape: f32[2,32,64], index: 4, kind: input, shape index: {}]
  %s5 = inlined_call_operand.vmem [shape: f32[2,1,64], index: 5, kind: input, shape index: {}]
  %s6 = inlined_call_operand.vmem [shape: f32[128,16], index: 6, kind: input, shape index: {}]
  %s7 = inlined_call_operand.vmem [shape: f32[1,16], index: 7, kind: input, shape index: {}]
  %s8 = inlined_call_operand.vmem [shape: f32[16,8], index: 8, kind: input, shape index: {}]
  %s9 = inlined_call_operand.vmem [shape: f32[1,8], index: 9, kind: input, shape index: {}]
  %s10 = inlined_call_operand.hbm [shape: f32[2,1,8], index: 10, kind: output, shape index: {}]
  %s11 = sld [smem:[#allocation0]]
  $region77: #{tpu_custom_call.1} parent=0
    _
  %s13 = ssub.s32 1, %s11
  %s14 = scalar_select 0, %s13, %s11
  $region1: #{tpu_custom_call.1} parent=0
    #allocation2 [shape = 'u8[1024]{0}', space=smem, size = 0x400, scoped, tag = 'input window, operand 0, single buffered']
    #allocation3 [shape = 's32[2]{0}', space=sflag, size = 0x8, scoped, tag = 'scoped memory for tpu_custom_call.1']
    #allocation4 [shape = 's32[2]{0}', space=sflag, size = 0x8, scoped, tag = 'scoped memory for tpu_custom_call.1']
    #allocation5 [shape = 'u8[1024]{0}', space=vmem, size = 0x400, scoped, tag = 'output window, operand 0']
    %15 = vsyncpa [#allocation4], 0
    %16 = vsyncpa [#allocation3], 0
    %s17 = scalar_lea.sflag [#allocation3], 1
    %18 = vsyncpa %s17, 0
    loop: start=0, step=1, limit=4
    $region2: #{tpu_custom_call.1} parent=1 // loop_pre_header
      _
    $region3: #{tpu_custom_call.1} parent=1 // loop_header
      %s20 = sphi 0, %s24
      %p21 = scmp.ge.s32.totalorder %s20, 4
      %s28 = sphi 0, %s28
      %s30 = sphi 0, %s28
      %s31 = sphi 0, %s30
      %s45 = sphi 0, %s31
      %s51 = sphi 0, %s53
      %s54 = sphi 0, %s51
      %s55 = sphi 0, %s54
      %s71 = sphi 0, %s55
      %s77 = sphi 0, %s79
      %s80 = sphi 0, %s77
      %s81 = sphi 0, %s80
      %s97 = sphi 0, %s81
      %s103 = sphi 0, %s105
      %s106 = sphi 0, %s103
      %s107 = sphi 0, %s106
      %s123 = sphi 0, %s107
      %s127 = sphi 0, %s127
      %s129 = sphi 0, %s127
      %s130 = sphi 0, %s129
      %s144 = sphi 0, %s130
      %s148 = sphi 0, %s148
      %s150 = sphi 0, %s148
      %s151 = sphi 0, %s150
      %s165 = sphi 0, %s151
      %s169 = sphi 0, %s169
      %s171 = sphi 0, %s169
      %s172 = sphi 0, %s171
      %s186 = sphi 0, %s172
      %s190 = sphi 0, %s190
      %s192 = sphi 0, %s190
      %s193 = sphi 0, %s192
      %s207 = sphi 0, %s193
      %s211 = sphi 0, %s211
      %s213 = sphi 0, %s211
      %s214 = sphi 0, %s213
      %s228 = sphi 0, %s214
      %s232 = sphi 0, %s232
      %s234 = sphi 0, %s232
      %s235 = sphi 0, %s234
      %s249 = sphi 0, %s235
      %s255 = sphi 0, %s257
      %s258 = sphi 0, %s255
      %s259 = sphi 0, %s258
      %s275 = sphi 0, %s259
    $region4: #{tpu_custom_call.1} parent=1 // loop_header_branch
      %23 = sbr.rel (%p21) target = $region8
    $region5: #{tpu_custom_call.1} parent=1 // loop_body
      %s25 = ssub.s32 %s20, 1
      %s26 = ssub.s32 %s20, 2
      %s27 = sadd.s32 %s20, 1
      %s29 = sadd.s32 %s28, 1
      %p32 = scmp.eq.s32.totalorder %s20, 1
      %p33 = scmp.ne.s32.totalorder %s28, %s30
      %p34 = scmp.eq.s32.totalorder %s20, 0
      %p35 = por %p33, %p34
      %p36 = scmp.ne.s32.totalorder %s28, %s30
      %p37 = scmp.eq.s32.totalorder %s25, 1
      %p38 = por %p36, %p37
      %p39 = scmp.ne.s32.totalorder %s30, %s31
      %p40 = scmp.eq.s32.totalorder %s25, 0
      %p41 = por %p39, %p40
      %p42 = scmp.ne.s32.totalorder %s30, %s31
      %p43 = scmp.eq.s32.totalorder %s26, 1
      %p44 = por %p42, %p43
      %p46 = scmp.ne.s32.totalorder %s31, %s45
      %p47 = scmp.eq.s32.totalorder %s26, 0
      %p48 = por %p46, %p47
      %s49 = ssub.s32 %s20, %s27
      %p50 = scmp.eq.s32.totalorder %s49, 0
      %s52 = sadd.s32 %s51, 1
      %s53 = scalar_select %p50, %s51, %s52
      %p56 = pneg %p50
      %p57 = scmp.eq.s32.totalorder %s20, 1
      %p58 = por %p56, %p57
      %p59 = scmp.ne.s32.totalorder %s51, %s54
      %p60 = scmp.eq.s32.totalorder %s20, 0
      %p61 = por %p59, %p60
      %p62 = scmp.ne.s32.totalorder %s51, %s54
      %p63 = scmp.eq.s32.totalorder %s25, 1
      %p64 = por %p62, %p63
      %p65 = scmp.ne.s32.totalorder %s54, %s55
      %p66 = scmp.eq.s32.totalorder %s25, 0
      %p67 = por %p65, %p66
      %p68 = scmp.ne.s32.totalorder %s54, %s55
      %p69 = scmp.eq.s32.totalorder %s26, 1
      %p70 = por %p68, %p69
      %p72 = scmp.ne.s32.totalorder %s55, %s71
      %p73 = scmp.eq.s32.totalorder %s26, 0
      %p74 = por %p72, %p73
      %s75 = ssub.s32 %s20, %s27
      %p76 = scmp.eq.s32.totalorder %s75, 0
      %s78 = sadd.s32 %s77, 1
      %s79 = scalar_select %p76, %s77, %s78
      %p82 = pneg %p76
      %p83 = scmp.eq.s32.totalorder %s20, 1
      %p84 = por %p82, %p83
      %p85 = scmp.ne.s32.totalorder %s77, %s80
      %p86 = scmp.eq.s32.totalorder %s20, 0
      %p87 = por %p85, %p86
      %p88 = scmp.ne.s32.totalorder %s77, %s80
      %p89 = scmp.eq.s32.totalorder %s25, 1
      %p90 = por %p88, %p89
      %p91 = scmp.ne.s32.totalorder %s80, %s81
      %p92 = scmp.eq.s32.totalorder %s25, 0
      %p93 = por %p91, %p92
      %p94 = scmp.ne.s32.totalorder %s80, %s81
      %p95 = scmp.eq.s32.totalorder %s26, 1
      %p96 = por %p94, %p95
      %p98 = scmp.ne.s32.totalorder %s81, %s97
      %p99 = scmp.eq.s32.totalorder %s26, 0
      %p100 = por %p98, %p99
      %s101 = ssub.s32 %s20, %s27
      %p102 = scmp.eq.s32.totalorder %s101, 0
      %s104 = sadd.s32 %s103, 1
      %s105 = scalar_select %p102, %s103, %s104
      %p108 = pneg %p102
      %p109 = scmp.eq.s32.totalorder %s20, 1
      %p110 = por %p108, %p109
      %p111 = scmp.ne.s32.totalorder %s103, %s106
      %p112 = scmp.eq.s32.totalorder %s20, 0
      %p113 = por %p111, %p112
      %p114 = scmp.ne.s32.totalorder %s103, %s106
      %p115 = scmp.eq.s32.totalorder %s25, 1
      %p116 = por %p114, %p115
      %p117 = scmp.ne.s32.totalorder %s106, %s107
      %p118 = scmp.eq.s32.totalorder %s25, 0
      %p119 = por %p117, %p118
      %p120 = scmp.ne.s32.totalorder %s106, %s107
      %p121 = scmp.eq.s32.totalorder %s26, 1
      %p122 = por %p120, %p121
      %p124 = scmp.ne.s32.totalorder %s107, %s123
      %p125 = scmp.eq.s32.totalorder %s26, 0
      %p126 = por %p124, %p125
      %s128 = sadd.s32 %s127, 1
      %p131 = scmp.eq.s32.totalorder %s20, 1
      %p132 = scmp.ne.s32.totalorder %s127, %s129
      %p133 = scmp.eq.s32.totalorder %s20, 0
      %p134 = por %p132, %p133
      %p135 = scmp.ne.s32.totalorder %s127, %s129
      %p136 = scmp.eq.s32.totalorder %s25, 1
      %p137 = por %p135, %p136
      %p138 = scmp.ne.s32.totalorder %s129, %s130
      %p139 = scmp.eq.s32.totalorder %s25, 0
      %p140 = por %p138, %p139
      %p141 = scmp.ne.s32.totalorder %s129, %s130
      %p142 = scmp.eq.s32.totalorder %s26, 1
      %p143 = por %p141, %p142
      %p145 = scmp.ne.s32.totalorder %s130, %s144
      %p146 = scmp.eq.s32.totalorder %s26, 0
      %p147 = por %p145, %p146
      %s149 = sadd.s32 %s148, 1
      %p152 = scmp.eq.s32.totalorder %s20, 1
      %p153 = scmp.ne.s32.totalorder %s148, %s150
      %p154 = scmp.eq.s32.totalorder %s20, 0
      %p155 = por %p153, %p154
      %p156 = scmp.ne.s32.totalorder %s148, %s150
      %p157 = scmp.eq.s32.totalorder %s25, 1
      %p158 = por %p156, %p157
      %p159 = scmp.ne.s32.totalorder %s150, %s151
      %p160 = scmp.eq.s32.totalorder %s25, 0
      %p161 = por %p159, %p160
      %p162 = scmp.ne.s32.totalorder %s150, %s151
      %p163 = scmp.eq.s32.totalorder %s26, 1
      %p164 = por %p162, %p163
      %p166 = scmp.ne.s32.totalorder %s151, %s165
      %p167 = scmp.eq.s32.totalorder %s26, 0
      %p168 = por %p166, %p167
      %s170 = sadd.s32 %s169, 1
      %p173 = scmp.eq.s32.totalorder %s20, 1
      %p174 = scmp.ne.s32.totalorder %s169, %s171
      %p175 = scmp.eq.s32.totalorder %s20, 0
      %p176 = por %p174, %p175
      %p177 = scmp.ne.s32.totalorder %s169, %s171
      %p178 = scmp.eq.s32.totalorder %s25, 1
      %p179 = por %p177, %p178
      %p180 = scmp.ne.s32.totalorder %s171, %s172
      %p181 = scmp.eq.s32.totalorder %s25, 0
      %p182 = por %p180, %p181
      %p183 = scmp.ne.s32.totalorder %s171, %s172
      %p184 = scmp.eq.s32.totalorder %s26, 1
      %p185 = por %p183, %p184
      %p187 = scmp.ne.s32.totalorder %s172, %s186
      %p188 = scmp.eq.s32.totalorder %s26, 0
      %p189 = por %p187, %p188
      %s191 = sadd.s32 %s190, 1
      %p194 = scmp.eq.s32.totalorder %s20, 1
      %p195 = scmp.ne.s32.totalorder %s190, %s192
      %p196 = scmp.eq.s32.totalorder %s20, 0
      %p197 = por %p195, %p196
      %p198 = scmp.ne.s32.totalorder %s190, %s192
      %p199 = scmp.eq.s32.totalorder %s25, 1
      %p200 = por %p198, %p199
      %p201 = scmp.ne.s32.totalorder %s192, %s193
      %p202 = scmp.eq.s32.totalorder %s25, 0
      %p203 = por %p201, %p202
      %p204 = scmp.ne.s32.totalorder %s192, %s193
      %p205 = scmp.eq.s32.totalorder %s26, 1
      %p206 = por %p204, %p205
      %p208 = scmp.ne.s32.totalorder %s193, %s207
      %p209 = scmp.eq.s32.totalorder %s26, 0
      %p210 = por %p208, %p209
      %s212 = sadd.s32 %s211, 1
      %p215 = scmp.eq.s32.totalorder %s20, 1
      %p216 = scmp.ne.s32.totalorder %s211, %s213
      %p217 = scmp.eq.s32.totalorder %s20, 0
      %p218 = por %p216, %p217
      %p219 = scmp.ne.s32.totalorder %s211, %s213
      %p220 = scmp.eq.s32.totalorder %s25, 1
      %p221 = por %p219, %p220
      %p222 = scmp.ne.s32.totalorder %s213, %s214
      %p223 = scmp.eq.s32.totalorder %s25, 0
      %p224 = por %p222, %p223
      %p225 = scmp.ne.s32.totalorder %s213, %s214
      %p226 = scmp.eq.s32.totalorder %s26, 1
      %p227 = por %p225, %p226
      %p229 = scmp.ne.s32.totalorder %s214, %s228
      %p230 = scmp.eq.s32.totalorder %s26, 0
      %p231 = por %p229, %p230
      %s233 = sadd.s32 %s232, 1
      %p236 = scmp.eq.s32.totalorder %s20, 1
      %p237 = scmp.ne.s32.totalorder %s232, %s234
      %p238 = scmp.eq.s32.totalorder %s20, 0
      %p239 = por %p237, %p238
      %p240 = scmp.ne.s32.totalorder %s232, %s234
      %p241 = scmp.eq.s32.totalorder %s25, 1
      %p242 = por %p240, %p241
      %p243 = scmp.ne.s32.totalorder %s234, %s235
      %p244 = scmp.eq.s32.totalorder %s25, 0
      %p245 = por %p243, %p244
      %p246 = scmp.ne.s32.totalorder %s234, %s235
      %p247 = scmp.eq.s32.totalorder %s26, 1
      %p248 = por %p246, %p247
      %p250 = scmp.ne.s32.totalorder %s235, %s249
      %p251 = scmp.eq.s32.totalorder %s26, 0
      %p252 = por %p250, %p251
      %s253 = ssub.s32 %s20, %s27
      %p254 = scmp.eq.s32.totalorder %s253, 0
      %s256 = sadd.s32 %s255, 1
      %s257 = scalar_select %p254, %s255, %s256
      %p260 = pneg %p254
      %p261 = scmp.eq.s32.totalorder %s20, 1
      %p262 = por %p260, %p261
      %p263 = scmp.ne.s32.totalorder %s255, %s258
      %p264 = scmp.eq.s32.totalorder %s20, 0
      %p265 = por %p263, %p264
      %p266 = scmp.ne.s32.totalorder %s255, %s258
      %p267 = scmp.eq.s32.totalorder %s25, 1
      %p268 = por %p266, %p267
      %p269 = scmp.ne.s32.totalorder %s258, %s259
      %p270 = scmp.eq.s32.totalorder %s25, 0
      %p271 = por %p269, %p270
      %p272 = scmp.ne.s32.totalorder %s258, %s259
      %p273 = scmp.eq.s32.totalorder %s26, 1
      %p274 = por %p272, %p273
      %p276 = scmp.ne.s32.totalorder %s259, %s275
      %p277 = scmp.eq.s32.totalorder %s26, 0
      %p278 = por %p276, %p277
      %p279 = scmp.le.s32.totalorder 1, %s20
      %p280 = scmp.lt.s32.totalorder %s20, 3
      %p281 = pnand %p279, %p280
      %p282 = pneg %p281
      // Predicated region
      $region9: #{tpu_custom_call.1} parent=5 // pred_check
        _
      $region10: #{tpu_custom_call.1} parent=5 // pred_check_branch
        %284 = sbr.rel (%p281) target = $region12
      $region11: #{tpu_custom_call.1} parent=5 // pred_region
        %s285 = ssub.s32 %s20, 1
        // Predicated region
        $region13: #{tpu_custom_call.1} parent=11 // pred_check
          %p286 = pneg %p41
        $region14: #{tpu_custom_call.1} parent=11 // pred_check_branch
          %288 = sbr.rel (%p286) target = $region16
        $region15: #{tpu_custom_call.1} parent=11 // pred_region
          %290 = vsyncadd [#allocation4], 0
          %s292 = sshll.u32 %s0, 4
          %s293 = int_to_ptr.vmem [resolvable:$true] %s292
          %295 = dma.vmem_to_smem %s293, 32, [#allocation2], [#allocation4]
        $region16: #{tpu_custom_call.1} parent=11 // pred_fallthru
          _
        // Predicated region
        $region17: #{tpu_custom_call.1} parent=11 // pred_check
          %p296 = pneg %p140
        $region18: #{tpu_custom_call.1} parent=11 // pred_check_branch
          %298 = sbr.rel (%p296) target = $region20
        $region19: #{tpu_custom_call.1} parent=11 // pred_region
          _
        $region20: #{tpu_custom_call.1} parent=11 // pred_fallthru
          _
        // Predicated region
        $region21: #{tpu_custom_call.1} parent=11 // pred_check
          %p299 = pneg %p161
        $region22: #{tpu_custom_call.1} parent=11 // pred_check_branch
          %301 = sbr.rel (%p299) target = $region24
        $region23: #{tpu_custom_call.1} parent=11 // pred_region
          _
        $region24: #{tpu_custom_call.1} parent=11 // pred_fallthru
          _
        // Predicated region
        $region25: #{tpu_custom_call.1} parent=11 // pred_check
          %p302 = pneg %p182
        $region26: #{tpu_custom_call.1} parent=11 // pred_check_branch
          %304 = sbr.rel (%p302) target = $region28
        $region27: #{tpu_custom_call.1} parent=11 // pred_region
          _
        $region28: #{tpu_custom_call.1} parent=11 // pred_fallthru
          _
        // Predicated region
        $region29: #{tpu_custom_call.1} parent=11 // pred_check
          %p305 = pneg %p203
        $region30: #{tpu_custom_call.1} parent=11 // pred_check_branch
          %307 = sbr.rel (%p305) target = $region32
        $region31: #{tpu_custom_call.1} parent=11 // pred_region
          _
        $region32: #{tpu_custom_call.1} parent=11 // pred_fallthru
          _
        // Predicated region
        $region33: #{tpu_custom_call.1} parent=11 // pred_check
          %p308 = pneg %p224
        $region34: #{tpu_custom_call.1} parent=11 // pred_check_branch
          %310 = sbr.rel (%p308) target = $region36
        $region35: #{tpu_custom_call.1} parent=11 // pred_region
          _
        $region36: #{tpu_custom_call.1} parent=11 // pred_fallthru
          _
        // Predicated region
        $region37: #{tpu_custom_call.1} parent=11 // pred_check
          %p311 = pneg %p245
        $region38: #{tpu_custom_call.1} parent=11 // pred_check_branch
          %313 = sbr.rel (%p311) target = $region40
        $region39: #{tpu_custom_call.1} parent=11 // pred_region
          _
        $region40: #{tpu_custom_call.1} parent=11 // pred_fallthru
          _
      $region12: #{tpu_custom_call.1} parent=5 // pred_fallthru
        _
      %p314 = scmp.lt.s32.totalorder %s20, 2
      // Predicated region
      $region41: #{tpu_custom_call.1} parent=5 // pred_check
        %p315 = pneg %p314
      $region42: #{tpu_custom_call.1} parent=5 // pred_check_branch
        %317 = sbr.rel (%p315) target = $region44
      $region43: #{tpu_custom_call.1} parent=5 // pred_region
        // Predicated region
        $region45: #{tpu_custom_call.1} parent=43 // pred_check
          %p318 = pneg %p61
        $region46: #{tpu_custom_call.1} parent=43 // pred_check_branch
          %320 = sbr.rel (%p318) target = $region48
        $region47: #{tpu_custom_call.1} parent=43 // pred_region
          %p321 = scmp.lt.s32.totalorder %s20, 1
          %s322 = scalar_select %p321, %s20, 1
          %s323 = smul.addr %s322, 8
          %s324 = scalar_lea.vmem %s1, %s323
        $region48: #{tpu_custom_call.1} parent=43 // pred_fallthru
          _
        // Predicated region
        $region49: #{tpu_custom_call.1} parent=43 // pred_check
          %p325 = pneg %p87
        $region50: #{tpu_custom_call.1} parent=43 // pred_check_branch
          %327 = sbr.rel (%p325) target = $region52
        $region51: #{tpu_custom_call.1} parent=43 // pred_region
          %p328 = scmp.lt.s32.totalorder %s20, 1
          %s329 = scalar_select %p328, %s20, 1
          %s330 = smul.addr %s329, 8
          %s331 = scalar_lea.vmem %s2, %s330
        $region52: #{tpu_custom_call.1} parent=43 // pred_fallthru
          _
        // Predicated region
        $region53: #{tpu_custom_call.1} parent=43 // pred_check
          %p332 = pneg %p113
        $region54: #{tpu_custom_call.1} parent=43 // pred_check_branch
          %334 = sbr.rel (%p332) target = $region56
        $region55: #{tpu_custom_call.1} parent=43 // pred_region
          %p335 = scmp.lt.s32.totalorder %s20, 1
          %s336 = scalar_select %p335, %s20, 1
          %s337 = smul.addr %s336, 8
          %s338 = scalar_lea.vmem %s3, %s337
        $region56: #{tpu_custom_call.1} parent=43 // pred_fallthru
          _
      $region44: #{tpu_custom_call.1} parent=5 // pred_fallthru
        _
      %p339 = scmp.le.s32.totalorder 1, %s20
      %p340 = scmp.lt.s32.totalorder %s20, 3
      %p341 = pnand %p339, %p340
      %p342 = pneg %p341
      // Predicated region
      $region57: #{tpu_custom_call.1} parent=5 // pred_check
        _
      $region58: #{tpu_custom_call.1} parent=5 // pred_check_branch
        %344 = sbr.rel (%p341) target = $region60
      $region59: #{tpu_custom_call.1} parent=5 // pred_region
        %s345 = ssub.s32 %s20, 1
        // Predicated region
        $region61: #{tpu_custom_call.1} parent=59 // pred_check
          %p346 = pneg %p41
        $region62: #{tpu_custom_call.1} parent=59 // pred_check_branch
          %348 = sbr.rel (%p346) target = $region64
        $region63: #{tpu_custom_call.1} parent=59 // pred_region
          %350 = dma.done [#allocation4], 32
        $region64: #{tpu_custom_call.1} parent=59 // pred_fallthru
          _
        %351 = sfence
        %p352 = pneg %p41
        %p353 = pneg %p38
        %p354 = scmp.lt.s32.totalorder %s25, 1
        %s355 = scalar_select %p354, %s25, 1
        %s356 = smul.addr %s355, 8
        %s357 = scalar_lea.vmem %s1, %s356
        %p358 = pneg %p67
        %p359 = pneg %p64
        %p360 = scmp.lt.s32.totalorder %s25, 1
        %s361 = scalar_select %p360, %s25, 1
        %s362 = smul.addr %s361, 8
        %s363 = scalar_lea.vmem %s2, %s362
        %p364 = pneg %p93
        %p365 = pneg %p90
        %p366 = scmp.lt.s32.totalorder %s25, 1
        %s367 = scalar_select %p366, %s25, 1
        %s368 = smul.addr %s367, 8
        %s369 = scalar_lea.vmem %s3, %s368
        %p370 = pneg %p119
        %p371 = pneg %p116
        %p372 = pneg %p140
        %p373 = pneg %p137
        %p374 = pneg %p161
        %p375 = pneg %p158
        %p376 = pneg %p182
        %p377 = pneg %p179
        %p378 = pneg %p203
        %p379 = pneg %p200
        %p380 = pneg %p224
        %p381 = pneg %p221
        %p382 = pneg %p245
        %p383 = pneg %p242
        %p384 = pneg %p271
        %p385 = pneg %p268
        %s386 = sand.u32 %s258, 1
        %s387 = scalar_lea.sflag [#allocation3], %s386
        %s388 = sand.u32 %s258, 1
        %s389 = scalar_lea.vmem [#allocation5], %s388
        %p390 = scmp.lt.s32.totalorder %s25, 1
        %s391 = scalar_select %p390, %s25, 1
        %s392 = smul.addr %s391, 8
        %s393 = scalar_lea.vmem %s1, %s392
        %p394 = scmp.lt.s32.totalorder %s25, 1
        %s395 = scalar_select %p394, %s25, 1
        %s396 = smul.addr %s395, 8
        %s397 = scalar_lea.vmem %s2, %s396
        %p398 = scmp.lt.s32.totalorder %s25, 1
        %s399 = scalar_select %p398, %s25, 1
        %s400 = smul.addr %s399, 8
        %s401 = scalar_lea.vmem %s3, %s400
        %v402 = vld [vmem:[%s393] sm:$0xff]
        %v403 = vld [vmem:[%s397] sm:$0xff]
        %v404 = vld [vmem:[%s401] sm:$0xff]
        %v405 = vld [vmem:[%s4] sm:$0xff]
        %v406 = vld [vmem:[%s4 + $0x8] sm:$0xff]
        %v407 = vld [vmem:[%s4 + $0x10] sm:$0xff]
        %v408 = vld [vmem:[%s4 + $0x18] sm:$0xff]
        %v409 = vld [vmem:[%s5] sm:$0x1]
        %v411 = vperm.slane %v409, 0
        %vm413 = vcmask 261120
        %v415 = vsel %vm413, %v402, 0
        %417 = vmatpush.msra.mxu0 0.0
        %418 = vmatpush.msra.mxu0 0.0
        %419 = vmatpush.msra.mxu0 0.0
        %420 = vmatpush.msra.mxu0 0.0
        %421 = vmatpush.msra.mxu0 0.0
        %422 = vmatpush.msra.mxu0 0.0
        %423 = vmatpush.msra.mxu0 0.0
        %424 = vmatpush.msra.mxu0 0.0
        %425 = vmatpush.msra.mxu0 0.0
        %426 = vmatpush.msra.mxu0 0.0
        %427 = vmatpush.msra.mxu0 0.0
        %428 = vmatpush.msra.mxu0 0.0
        %429 = vmatpush.msra.mxu0 %v408
        %430 = vmatpush.msra.mxu0 %v407
        %431 = vmatpush.msra.mxu0 %v406
        %432 = vmatpush.msra.mxu0 %v405
        %433 = vmatmul.f32.gmra.mxu0 %v415
        %v434 = vpop.f32.mrf.mxu0
        %v435 = vadd.f32 %v411, %v434
        %436 = vdwg.mxu0
        %vm437 = vcmask 64512
        %v439 = vsel %vm437, %v403, 0
        %441 = vmatpush.msra.mxu0 0.0
        %442 = vmatpush.msra.mxu0 0.0
        %443 = vmatpush.msra.mxu0 0.0
        %444 = vmatpush.msra.mxu0 0.0
        %445 = vmatpush.msra.mxu0 0.0
        %446 = vmatpush.msra.mxu0 0.0
        %447 = vmatpush.msra.mxu0 0.0
        %448 = vmatpush.msra.mxu0 0.0
        %449 = vmatpush.msra.mxu0 0.0
        %450 = vmatpush.msra.mxu0 0.0
        %451 = vmatpush.msra.mxu0 0.0
        %452 = vmatpush.msra.mxu0 0.0
        %453 = vmatpush.msra.mxu0 0.0
        %454 = vmatpush.msra.mxu0 0.0
        %455 = vmatpush.msra.mxu0 0.0
        %456 = vmatpush.msra.mxu0 %v435
        %457 = vmatmul.f32.gmra.mxu0 %v439
        %v458 = vpop.f32.mrf.mxu0
        %v459 = vadd.f32 0.0, %v458
        %460 = vdwg.mxu0
        %462 = vrot.lane.b32.xlu0 %v435, 96
        %v463 = vpop.permute.xlu0 %462
        %v466 = vsel %vm437, %v404, 0
        %468 = vmatpush.msra.mxu0 0.0
        %469 = vmatpush.msra.mxu0 0.0
        %470 = vmatpush.msra.mxu0 0.0
        %471 = vmatpush.msra.mxu0 0.0
        %472 = vmatpush.msra.mxu0 0.0
        %473 = vmatpush.msra.mxu0 0.0
        %474 = vmatpush.msra.mxu0 0.0
        %475 = vmatpush.msra.mxu0 0.0
        %476 = vmatpush.msra.mxu0 0.0
        %477 = vmatpush.msra.mxu0 0.0
        %478 = vmatpush.msra.mxu0 0.0
        %479 = vmatpush.msra.mxu0 0.0
        %480 = vmatpush.msra.mxu0 0.0
        %481 = vmatpush.msra.mxu0 0.0
        %482 = vmatpush.msra.mxu0 0.0
        %483 = vmatpush.msra.mxu0 %v463
        %484 = vmatmul.f32.gmra.mxu0 %v466
        %v485 = vpop.f32.mrf.mxu0
        %v486 = vadd.f32 0.0, %v485
        %487 = vdwg.mxu0
        %vm488 = vcmp.ge.f32.partialorder %v459, 0.0
        %v489 = vmul.f32 %v459, 0.01
        %v490 = vsel %vm488, %v459, %v489
        %vm491 = vcmp.ge.f32.partialorder %v486, 0.0
        %v492 = vmul.f32 %v486, 0.01
        %v493 = vsel %vm491, %v486, %v492
        %v494 = vadd.f32 %v490, %v493
        %s495 = scalar_lea.vmem %s4, 32
        %v496 = vld [vmem:[%s495] sm:$0xff]
        %v497 = vld [vmem:[%s495 + $0x8] sm:$0xff]
        %v498 = vld [vmem:[%s495 + $0x10] sm:$0xff]
        %v499 = vld [vmem:[%s495 + $0x18] sm:$0xff]
        %s500 = scalar_lea.vmem %s5, 1
        %v501 = vld [vmem:[%s500] sm:$0x1]
        %v503 = vperm.slane %v501, 0
        %v506 = vsel %vm413, %v494, 0
        %508 = vmatpush.msra.mxu0 0.0
        %509 = vmatpush.msra.mxu0 0.0
        %510 = vmatpush.msra.mxu0 0.0
        %511 = vmatpush.msra.mxu0 0.0
        %512 = vmatpush.msra.mxu0 0.0
        %513 = vmatpush.msra.mxu0 0.0
        %514 = vmatpush.msra.mxu0 0.0
        %515 = vmatpush.msra.mxu0 0.0
        %516 = vmatpush.msra.mxu0 0.0
        %517 = vmatpush.msra.mxu0 0.0
        %518 = vmatpush.msra.mxu0 0.0
        %519 = vmatpush.msra.mxu0 0.0
        %520 = vmatpush.msra.mxu0 %v499
        %521 = vmatpush.msra.mxu0 %v498
        %522 = vmatpush.msra.mxu0 %v497
        %523 = vmatpush.msra.mxu0 %v496
        %524 = vmatmul.f32.gmra.mxu0 %v506
        %v525 = vpop.f32.mrf.mxu0
        %v526 = vadd.f32 %v503, %v525
        %527 = vdwg.mxu0
        %528 = vmatpush.msra.mxu0 0.0
        %529 = vmatpush.msra.mxu0 0.0
        %530 = vmatpush.msra.mxu0 0.0
        %531 = vmatpush.msra.mxu0 0.0
        %532 = vmatpush.msra.mxu0 0.0
        %533 = vmatpush.msra.mxu0 0.0
        %534 = vmatpush.msra.mxu0 0.0
        %535 = vmatpush.msra.mxu0 0.0
        %536 = vmatpush.msra.mxu0 0.0
        %537 = vmatpush.msra.mxu0 0.0
        %538 = vmatpush.msra.mxu0 0.0
        %539 = vmatpush.msra.mxu0 0.0
        %540 = vmatpush.msra.mxu0 0.0
        %541 = vmatpush.msra.mxu0 0.0
        %542 = vmatpush.msra.mxu0 0.0
        %543 = vmatpush.msra.mxu0 %v526
        %544 = vmatmul.f32.gmra.mxu0 %v439
        %v545 = vpop.f32.mrf.mxu0
        %v546 = vadd.f32 0.0, %v545
        %547 = vdwg.mxu0
        %549 = vrot.lane.b32.xlu0 %v526, 96
        %v550 = vpop.permute.xlu0 %549
        %552 = vmatpush.msra.mxu0 0.0
        %553 = vmatpush.msra.mxu0 0.0
        %554 = vmatpush.msra.mxu0 0.0
        %555 = vmatpush.msra.mxu0 0.0
        %556 = vmatpush.msra.mxu0 0.0
        %557 = vmatpush.msra.mxu0 0.0
        %558 = vmatpush.msra.mxu0 0.0
        %559 = vmatpush.msra.mxu0 0.0
        %560 = vmatpush.msra.mxu0 0.0
        %561 = vmatpush.msra.mxu0 0.0
        %562 = vmatpush.msra.mxu0 0.0
        %563 = vmatpush.msra.mxu0 0.0
        %564 = vmatpush.msra.mxu0 0.0
        %565 = vmatpush.msra.mxu0 0.0
        %566 = vmatpush.msra.mxu0 0.0
        %567 = vmatpush.msra.mxu0 %v550
        %568 = vmatmul.f32.gmra.mxu0 %v466
        %v569 = vpop.f32.mrf.mxu0
        %v570 = vadd.f32 0.0, %v569
        %571 = vdwg.mxu0
        %vm572 = vcmp.ge.f32.partialorder %v546, 0.0
        %v573 = vmul.f32 %v546, 0.01
        %v574 = vsel %vm572, %v546, %v573
        %vm575 = vcmp.ge.f32.partialorder %v570, 0.0
        %v576 = vmul.f32 %v570, 0.01
        %v577 = vsel %vm575, %v570, %v576
        %v578 = vadd.f32 %v574, %v577
        %s579 = smul.u32 %s25, 128
        %s580 = sld [smem:[#allocation2 + %s579]]
        %s581 = sadd.s32 %s579, 1
        %s582 = sld [smem:[#allocation2 + %s581]]
        %s583 = sadd.s32 %s579, 2
        %s584 = sld [smem:[#allocation2 + %s583]]
        %s585 = sadd.s32 %s579, 3
        %s586 = sld [smem:[#allocation2 + %s585]]
        %s587 = scalar_lea.vmem %s393, %s580
        %v588 = vld [vmem:[%s587] sm:$0x1]
        %s589 = scalar_lea.vmem %s393, %s584
        %v590 = vld [vmem:[%s589] sm:$0x1]
        %v591 = vlaneseq
        %v592 = vshrl.u32 %v591, 7
        %v593 = vstv %s580
        %vm594 = vcmp.ge.s32.totalorder %v592, %v593
        %v595 = vstv %s582
        %vm596 = vcmp.le.s32.totalorder %v592, %v595
        %vm597 = vmand %vm594, %vm596
        %v598 = vsel %vm597, %v578, -3.4e+38
        %v599 = vsel %vm413, %v598, -inf
        %v600 = vrot.slane %v599, 4
        %v601 = vmax.f32 %v599, %v600
        %v602 = vrot.slane %v601, 2
        %v603 = vmax.f32 %v601, %v602
        %v604 = vrot.slane %v603, 1
        %v605 = vmax.f32 %v603, %v604
        %v606 = vstv %s584
        %vm607 = vcmp.ge.s32.totalorder %v592, %v606
        %v608 = vstv %s586
        %vm609 = vcmp.le.s32.totalorder %v592, %v608
        %vm610 = vmand %vm607, %vm609
        %v611 = vsel %vm610, %v578, -3.4e+38
        %v612 = vsel %vm413, %v611, -inf
        %v613 = vrot.slane %v612, 4
        %v614 = vmax.f32 %v612, %v613
        %v615 = vrot.slane %v614, 2
        %v616 = vmax.f32 %v614, %v615
        %v617 = vrot.slane %v616, 1
        %v618 = vmax.f32 %v616, %v617
        %620 = vrot.lane.b32.xlu0 %v590, 32
        %v621 = vpop.permute.xlu0 %620
        %624 = vrot.lane.b32.xlu0 %v605, 64
        %v625 = vpop.permute.xlu0 %624
        %628 = vrot.lane.b32.xlu0 %v618, 96
        %v629 = vpop.permute.xlu0 %628
        %v631 = vsel %vm413, %v588, %v621
        %vm632 = vcmask 523264
        %v633 = vsel %vm632, %v631, %v625
        %vm634 = vcmask 785408
        %v635 = vsel %vm634, %v633, %v629
        %v636 = vld [vmem:[%s6] sm:$0xff]
        %v637 = vld [vmem:[%s6 + $0x8] sm:$0xff]
        %v638 = vld [vmem:[%s6 + $0x10] sm:$0xff]
        %v639 = vld [vmem:[%s6 + $0x18] sm:$0xff]
        %v640 = vld [vmem:[%s6 + $0x20] sm:$0xff]
        %v641 = vld [vmem:[%s6 + $0x28] sm:$0xff]
        %v642 = vld [vmem:[%s6 + $0x30] sm:$0xff]
        %v643 = vld [vmem:[%s6 + $0x38] sm:$0xff]
        %v644 = vld [vmem:[%s6 + $0x40] sm:$0xff]
        %v645 = vld [vmem:[%s6 + $0x48] sm:$0xff]
        %v646 = vld [vmem:[%s6 + $0x50] sm:$0xff]
        %v647 = vld [vmem:[%s6 + $0x58] sm:$0xff]
        %v648 = vld [vmem:[%s6 + $0x60] sm:$0xff]
        %v649 = vld [vmem:[%s6 + $0x68] sm:$0xff]
        %v650 = vld [vmem:[%s6 + $0x70] sm:$0xff]
        %v651 = vld [vmem:[%s6 + $0x78] sm:$0xff]
        %v652 = vld [vmem:[%s7] sm:$0x1]
        %653 = vmatpush.msra.mxu0 %v651
        %654 = vmatpush.msra.mxu0 %v650
        %655 = vmatpush.msra.mxu0 %v649
        %656 = vmatpush.msra.mxu0 %v648
        %657 = vmatpush.msra.mxu0 %v647
        %658 = vmatpush.msra.mxu0 %v646
        %659 = vmatpush.msra.mxu0 %v645
        %660 = vmatpush.msra.mxu0 %v644
        %661 = vmatpush.msra.mxu0 %v643
        %662 = vmatpush.msra.mxu0 %v642
        %663 = vmatpush.msra.mxu0 %v641
        %664 = vmatpush.msra.mxu0 %v640
        %665 = vmatpush.msra.mxu0 %v639
        %666 = vmatpush.msra.mxu0 %v638
        %667 = vmatpush.msra.mxu0 %v637
        %668 = vmatpush.msra.mxu0 %v636
        %669 = vmatmul.f32.gmra.mxu0 %v635
        %v670 = vpop.f32.mrf.mxu0
        %v671 = vadd.f32 %v652, %v670
        %672 = vdwg.mxu0
        %vm673 = vcmp.ge.f32.partialorder %v671, 0.0
        %v674 = vmul.f32 %v671, 0.01
        %v675 = vsel %vm673, %v671, %v674
        %v676 = vld [vmem:[%s8] sm:$0xff]
        %v677 = vld [vmem:[%s8 + $0x8] sm:$0xff]
        %v678 = vld [vmem:[%s9] sm:$0x1]
        %vm679 = vcmask 130048
        %v681 = vsel %vm679, %v675, 0
        %683 = vmatpush.msra.mxu0 0.0
        %684 = vmatpush.msra.mxu0 0.0
        %685 = vmatpush.msra.mxu0 0.0
        %686 = vmatpush.msra.mxu0 0.0
        %687 = vmatpush.msra.mxu0 0.0
        %688 = vmatpush.msra.mxu0 0.0
        %689 = vmatpush.msra.mxu0 0.0
        %690 = vmatpush.msra.mxu0 0.0
        %691 = vmatpush.msra.mxu0 0.0
        %692 = vmatpush.msra.mxu0 0.0
        %693 = vmatpush.msra.mxu0 0.0
        %694 = vmatpush.msra.mxu0 0.0
        %695 = vmatpush.msra.mxu0 0.0
        %696 = vmatpush.msra.mxu0 0.0
        %697 = vmatpush.msra.mxu0 %v677
        %698 = vmatpush.msra.mxu0 %v676
        %699 = vmatmul.f32.gmra.mxu0 %v681
        %v700 = vpop.f32.mrf.mxu0
        %v701 = vadd.f32 %v678, %v700
        %702 = vdwg.mxu0
        %vm703 = vcmask 57344
        %704 = vst.msk [vmem:[%s389] sm:$0x1] %vm703, %v701
        %s705 = sand.u32 %s258, 1
        %s706 = scalar_lea.sflag [#allocation3], %s705
        %s707 = sand.u32 %s258, 1
        %s708 = scalar_lea.vmem [#allocation5], %s707
        // Predicated region
        $region65: #{tpu_custom_call.1} parent=59 // pred_check
          %p709 = pneg %p268
        $region66: #{tpu_custom_call.1} parent=59 // pred_check_branch
          %711 = sbr.rel (%p709) target = $region68
        $region67: #{tpu_custom_call.1} parent=59 // pred_region
          %713 = vsyncadd %s706, 0
          %s714 = scalar_lea.hbm %s10, %s25
          %s716 = sshll.u32 %s708, 4
          %s717 = int_to_ptr.vmem [resolvable:$true] %s716
          %s718 = sshll.u32 %s714, 4
          %s719 = int_to_ptr.hbm [resolvable:$true] %s718
          %721 = dma.vmem_to_hbm [thread:$0]  %s717, 16, %s719, %s706
        $region68: #{tpu_custom_call.1} parent=59 // pred_fallthru
          _
      $region60: #{tpu_custom_call.1} parent=5 // pred_fallthru
        _
      %p722 = scmp.le.s32.totalorder 2, %s20
      // Predicated region
      $region69: #{tpu_custom_call.1} parent=5 // pred_check
        %p723 = pneg %p722
      $region70: #{tpu_custom_call.1} parent=5 // pred_check_branch
        %725 = sbr.rel (%p723) target = $region72
      $region71: #{tpu_custom_call.1} parent=5 // pred_region
        %s726 = ssub.s32 %s20, 2
        // Predicated region
        $region73: #{tpu_custom_call.1} parent=71 // pred_check
          %p727 = pneg %p274
        $region74: #{tpu_custom_call.1} parent=71 // pred_check_branch
          %729 = sbr.rel (%p727) target = $region76
        $region75: #{tpu_custom_call.1} parent=71 // pred_region
          %s730 = sand.u32 %s259, 1
          %s731 = scalar_lea.sflag [#allocation3], %s730
          %s732 = sand.u32 %s259, 1
          %s733 = scalar_lea.vmem [#allocation5], %s732
          %735 = dma.done %s731, 16
        $region76: #{tpu_custom_call.1} parent=71 // pred_fallthru
          _
      $region72: #{tpu_custom_call.1} parent=5 // pred_fallthru
        _
    $region6: #{tpu_custom_call.1} parent=1 // loop_footer
      %s24 = sadd.s32 1, %s20
    $region7: #{tpu_custom_call.1} parent=1 // loop_footer_branch
      %19 = sbr.rel target = $region3
    $region8: #{tpu_custom_call.1} parent=1 // loop_exit
      _
    %736 = vsyncpa [#allocation3], 1
    %s737 = scalar_lea.sflag [#allocation3], 1
    %738 = vsyncpa %s737, 1
    %739 = vsyncpa [#allocation4], 1
    %s740 = scalar_lea.sflag [#allocation4], 1
    %741 = vsyncpa %s740, 1

</llo_original>
